<compile_context>
chip_gen: v5e
topology: v5e:2x2
jax: 0.10.0
libtpu: 0.0.40
codegen_flags: <defaults>
</compile_context>

<pallas_src>
import jax
import jax.numpy as jnp
import numpy as np
from jax import lax
from jax.experimental import pallas as pl
from jax.experimental.pallas import tpu as pltpu

SUBLANE = 8     # batch rows padded to a full 8-sublane tile
LANE = 128      # output columns padded to a full 128-lane tile


# ----------------------------------------------------------------------------
# Kernel: single invocation, whole sequence resident in VMEM.
# Gate columns arrive pre-permuted to (i, f, o, g).
# ----------------------------------------------------------------------------
def encoder_kernel(x_ref, wf_ref, bf_ref, whh_ref, wout_ref, bout_ref,
                   y_ref, h_out_ref, c_out_ref,
                   gx_sc, hs_sc):
    H = whh_ref.shape[0]
    BP = h_out_ref.shape[1]            # padded batch rows (multiple of 8)
    S = x_ref.shape[0] // BP

    # --- hoisted input path: one matmul + one bias add for the whole sequence
    gx_sc[...] = (jnp.dot(x_ref[...], wf_ref[...],
                          preferred_element_type=jnp.float32)
                  + bf_ref[...])                                   # (S*BP, 4H)

    whh = whh_ref[...]                                             # (H, 4H)

    # --- serial recurrence: one small matmul + grouped gate math per step
    def step(t, carry):
        h_prev, c_prev = carry
        row = pl.multiple_of(t * BP, SUBLANE)                      # aligned tile
        gates = gx_sc[pl.ds(row, BP)] + jnp.dot(
            h_prev, whh, preferred_element_type=jnp.float32)       # (BP, 4H)

        # Columns are ordered [i | f | o | g]: 2 EUP pushes per step.
        sig = jax.nn.sigmoid(gates[:, :3 * H])
        g = jnp.tanh(gates[:, 3 * H:])
        i = sig[:, 0 * H:1 * H]
        f = sig[:, 1 * H:2 * H]
        o = sig[:, 2 * H:3 * H]

        c_new = f * c_prev + i * g
        h_new = o * jnp.tanh(c_new)
        hs_sc[pl.ds(row, BP)] = h_new                              # aligned store
        return (h_new, c_new)

    h0 = jnp.zeros((BP, H), jnp.float32)
    c0 = jnp.zeros((BP, H), jnp.float32)
    h_n, c_n = lax.fori_loop(0, S, step, (h0, c0), unroll=min(S, 8))

    h_out_ref[0] = h_n.astype(h_out_ref.dtype)
    c_out_ref[0] = c_n.astype(c_out_ref.dtype)

    # --- hoisted output projection: one matmul + one lane-dense store
    y = jnp.dot(hs_sc[...], wout_ref[...],
                preferred_element_type=jnp.float32) + bout_ref[...]  # (S*BP, O_pad)
    y_ref[...] = y.astype(y_ref.dtype)


# ----------------------------------------------------------------------------
# Wrapper: offline weight fusion / permutation / padding + layout plumbing
# ----------------------------------------------------------------------------
def encoder_forward(action, params):
    """action: (B, S, input_dim) float32 (batch_first, like the PyTorch module)."""
    B, S, D_in = action.shape
    win, bin_ = params["win"], params["bin"]
    wih, whh = params["wih"], params["whh"]
    bih, bhh = params["bih"], params["bhh"]
    wout, bout = params["wout"], params["bout"]
    H = whh.shape[0]
    O = wout.shape[1]

    # (1) Fold the input Linear into the gate projection (exact, linear algebra).
    w_fused = win @ wih                               # (D_in, 4H)
    b_fused = bin_ @ wih + bih + bhh                  # (1, 4H)

    # (2) Permute gate columns from PyTorch (i, f, g, o) to (i, f, o, g).
    perm = np.concatenate([np.arange(0, 2 * H),
                           np.arange(3 * H, 4 * H),
                           np.arange(2 * H, 3 * H)])
    w_fused = w_fused[:, perm]
    b_fused = b_fused[:, perm]
    whh_p = whh[:, perm]

    # (3) Pad output columns to a full 128-lane tile (dense vst epilogue).
    O_pad = ((O + LANE - 1) // LANE) * LANE
    wout_p = jnp.zeros((H, O_pad), jnp.float32).at[:, :O].set(wout)
    bout_p = jnp.zeros((1, O_pad), jnp.float32).at[:, :O].set(bout)

    # (4) Time-major input, batch rows zero-padded to a multiple of 8 sublanes.
    BP = ((B + SUBLANE - 1) // SUBLANE) * SUBLANE
    x_tm = jnp.transpose(action, (1, 0, 2))                        # (S, B, D_in)
    x_pad = jnp.zeros((S, BP, D_in), jnp.float32).at[:, :B, :].set(x_tm)
    x_flat = jnp.reshape(x_pad, (S * BP, D_in))

    vmem = pl.BlockSpec(memory_space=pltpu.MemorySpace.VMEM)

    y_flat, h_pad, c_pad = pl.pallas_call(
        encoder_kernel,
        out_shape=(
            jax.ShapeDtypeStruct((S * BP, O_pad), jnp.float32),    # y, time-major
            jax.ShapeDtypeStruct((1, BP, H), jnp.float32),         # hidden
            jax.ShapeDtypeStruct((1, BP, H), jnp.float32),         # cell
        ),
        in_specs=[vmem] * 6,
        out_specs=(vmem, vmem, vmem),
        scratch_shapes=[
            pltpu.VMEM((S * BP, 4 * H), jnp.float32),              # Gx
            pltpu.VMEM((S * BP, H), jnp.float32),                  # h history
        ],
        compiler_params=pltpu.CompilerParams(
            vmem_limit_bytes=32 * 1024 * 1024),
        # Note: at B=2 a single invocation on one TensorCore is optimal; for
        # large batches on v7x add a leading "parallel" batch grid axis so both
        # TCs run independent batch halves of the recurrence.
    )(x_flat, w_fused, b_fused, whh_p, wout_p, bout_p)

    # Strip batch padding / lane padding; padded rows hold garbage by design.
    y = jnp.transpose(
        jnp.reshape(y_flat, (S, BP, O_pad))[:, :B, :O], (1, 0, 2))   # (B, S, O)
    h_n = h_pad[:, :B, :]
    c_n = c_pad[:, :B, :]
    return y, h_n, c_n


# ----------------------------------------------------------------------------
# Pure-JAX reference (PyTorch semantics, original gate order, no fusion)
# ----------------------------------------------------------------------------
def encoder_reference(action, params):
    win, bin_ = params["win"], params["bin"]
    wih, whh = params["wih"], params["whh"]
    bih, bhh = params["bih"], params["bhh"]
    wout, bout = params["wout"], params["bout"]
    H = whh.shape[0]
    B = action.shape[0]

    e = action @ win + bin_                         # (B, S, E)

    def step(carry, x_t):
        h, c = carry
        gates = x_t @ wih + h @ whh + bih + bhh
        i = jax.nn.sigmoid(gates[:, 0 * H:1 * H])
        f = jax.nn.sigmoid(gates[:, 1 * H:2 * H])
        g = jnp.tanh(gates[:, 2 * H:3 * H])
        o = jax.nn.sigmoid(gates[:, 3 * H:4 * H])
        c = f * c + i * g
        h = o * jnp.tanh(c)
        return (h, c), h

    h0 = jnp.zeros((B, H), jnp.float32)
    c0 = jnp.zeros((B, H), jnp.float32)
    (h_n, c_n), hs = jax.lax.scan(step, (h0, c0), jnp.transpose(e, (1, 0, 2)))
    outs = jnp.transpose(hs, (1, 0, 2))             # (B, S, H)
    y = outs @ wout + bout
    return y, h_n[None], c_n[None]


# ----------------------------------------------------------------------------
# Deterministic parameter init (mimicking layer_init(..., 0.001) scaling and
# PyTorch LSTM's uniform(+-1/sqrt(H)) init; synthetic, not a checkpoint load).
# ----------------------------------------------------------------------------
def init_params(key, input_dim, embed_dim, hid_dim, output_dim):
    ks = jax.random.split(key, 6)
    scale_lstm = 1.0 / np.sqrt(hid_dim)
    return {
        # Linear layers: weights stored as (in, out); biases as (1, out).
        "win":  0.001 * jax.random.normal(ks[0], (input_dim, embed_dim), jnp.float32),
        "bin":  jnp.zeros((1, embed_dim), jnp.float32),
        "wout": 0.001 * jax.random.normal(ks[1], (hid_dim, output_dim), jnp.float32),
        "bout": jnp.zeros((1, output_dim), jnp.float32),
        # LSTM params, gate order (i, f, g, o), stored as (in, 4H) / (H, 4H).
        # (Torch stores weight_ih/hh as (4H, in); transpose when loading real ckpts.)
        "wih": jax.random.uniform(ks[2], (embed_dim, 4 * hid_dim), jnp.float32,
                                  -scale_lstm, scale_lstm),
        "whh": jax.random.uniform(ks[3], (hid_dim, 4 * hid_dim), jnp.float32,
                                  -scale_lstm, scale_lstm),
        "bih": jax.random.uniform(ks[4], (1, 4 * hid_dim), jnp.float32,
                                  -scale_lstm, scale_lstm),
        "bhh": jax.random.uniform(ks[5], (1, 4 * hid_dim), jnp.float32,
                                  -scale_lstm, scale_lstm),
    }


if __name__ == "__main__":
    # Small shapes consistent with the module's forward.
    B, S = 2, 8
    input_dim, embed_dim, hid_dim, output_dim = 4, 16, 32, 8

    key = jax.random.PRNGKey(0)
    k_param, k_x = jax.random.split(key)
    params = init_params(k_param, input_dim, embed_dim, hid_dim, output_dim)
    action = jax.random.normal(k_x, (B, S, input_dim), jnp.float32)

    y, h_n, c_n = encoder_forward(action, params)
    jax.block_until_ready((y, h_n, c_n))

    y_ref, h_ref, c_ref = encoder_reference(action, params)
    np.testing.assert_allclose(np.asarray(y), np.asarray(y_ref), rtol=1e-5, atol=1e-5)
    np.testing.assert_allclose(np.asarray(h_n), np.asarray(h_ref), rtol=1e-5, atol=1e-5)
    np.testing.assert_allclose(np.asarray(c_n), np.asarray(c_ref), rtol=1e-5, atol=1e-5)

    print("KERNEL_OK")
</pallas_src>

<mosaic_0001>
module attributes {stable_mosaic.version = 11 : i64} {
  func.func @encoder_kernel(%arg0: memref<64x4xf32, #tpu.memory_space<vmem>>, %arg1: memref<4x128xf32, #tpu.memory_space<vmem>>, %arg2: memref<1x128xf32, #tpu.memory_space<vmem>>, %arg3: memref<32x128xf32, #tpu.memory_space<vmem>>, %arg4: memref<32x128xf32, #tpu.memory_space<vmem>>, %arg5: memref<1x128xf32, #tpu.memory_space<vmem>>, %arg6: memref<64x128xf32, #tpu.memory_space<vmem>>, %arg7: memref<1x8x32xf32, #tpu.memory_space<vmem>>, %arg8: memref<1x8x32xf32, #tpu.memory_space<vmem>>, %arg9: memref<64x128xf32, #tpu.memory_space<vmem>>, %arg10: memref<64x32xf32, #tpu.memory_space<vmem>>) attributes {dimension_semantics = [], scalar_prefetch = 0 : i64, scratch_operands = 2 : i64, tpu.core_type = #tpu.core_type<tc>} {
    %c0 = arith.constant 0 : index
    %c0_0 = arith.constant 0 : index
    %0 = vector.load %arg0[%c0, %c0_0] : memref<64x4xf32, #tpu.memory_space<vmem>>, vector<64x4xf32>
    %c0_1 = arith.constant 0 : index
    %c0_2 = arith.constant 0 : index
    %1 = vector.load %arg1[%c0_1, %c0_2] : memref<4x128xf32, #tpu.memory_space<vmem>>, vector<4x128xf32>
    %cst = arith.constant dense<0.000000e+00> : vector<64x128xf32>
    %2 = tpu.matmul %0, %1, %cst {dimension_numbers = #tpu.dot_dimension_numbers<[1], [0], [0], [1], [0, 0, 1, 1], [], []>} : vector<64x4xf32>, vector<4x128xf32>, vector<64x128xf32> -> vector<64x128xf32>
    %c0_3 = arith.constant 0 : index
    %c0_4 = arith.constant 0 : index
    %3 = vector.load %arg2[%c0_3, %c0_4] : memref<1x128xf32, #tpu.memory_space<vmem>>, vector<1x128xf32>
    %4 = vector.broadcast %3 : vector<1x128xf32> to vector<64x128xf32>
    %5 = arith.addf %2, %4 : vector<64x128xf32>
    %c0_5 = arith.constant 0 : index
    %c0_6 = arith.constant 0 : index
    %6 = vector.load %arg9[%c0_5, %c0_6] : memref<64x128xf32, #tpu.memory_space<vmem>>, vector<64x128xf32>
    tpu.vector_store %arg9[%c0_5, %c0_6], %5 {strides = array<i32>} : memref<64x128xf32, #tpu.memory_space<vmem>>, vector<64x128xf32>,
    %c0_7 = arith.constant 0 : index
    %c0_8 = arith.constant 0 : index
    %7 = vector.load %arg3[%c0_7, %c0_8] : memref<32x128xf32, #tpu.memory_space<vmem>>, vector<32x128xf32>
    %cst_9 = arith.constant 0.000000e+00 : f32
    %8 = vector.broadcast %cst_9 : f32 to vector<8x32xf32>
    %cst_10 = arith.constant 0.000000e+00 : f32
    %9 = vector.broadcast %cst_10 : f32 to vector<8x32xf32>
    %c0_i32 = arith.constant 0 : i32
    %c8_i32 = arith.constant 8 : i32
    %10 = arith.muli %c0_i32, %c8_i32 : i32
    %11 = tpu.assume_multiple %10, 8 : i32
    %12 = arith.index_cast %11 : i32 to index
    %c0_11 = arith.constant 0 : index
    %13 = vector.load %arg9[%12, %c0_11] : memref<64x128xf32, #tpu.memory_space<vmem>>, vector<8x128xf32>
    %cst_12 = arith.constant dense<0.000000e+00> : vector<8x128xf32>
    %14 = tpu.matmul %8, %7, %cst_12 {dimension_numbers = #tpu.dot_dimension_numbers<[1], [0], [0], [1], [0, 0, 1, 1], [], []>} : vector<8x32xf32>, vector<32x128xf32>, vector<8x128xf32> -> vector<8x128xf32>
    %15 = arith.addf %13, %14 : vector<8x128xf32>
    %16 = vector.extract_strided_slice %15 {offsets = [0, 0], sizes = [8, 96], strides = [1, 1]} : vector<8x128xf32> to vector<8x96xf32>
    %17 = arith.negf %16 : vector<8x96xf32>
    %18 = math.exp %17 : vector<8x96xf32>
    %cst_13 = arith.constant 1.000000e+00 : f32
    %19 = vector.broadcast %cst_13 : f32 to vector<8x96xf32>
    %20 = arith.addf %19, %18 : vector<8x96xf32>
    %21 = arith.divf %19, %20 : vector<8x96xf32>
    %22 = vector.extract_strided_slice %15 {offsets = [0, 96], sizes = [8, 32], strides = [1, 1]} : vector<8x128xf32> to vector<8x32xf32>
    %23 = math.tanh %22 : vector<8x32xf32>
    %24 = vector.extract_strided_slice %21 {offsets = [0, 0], sizes = [8, 32], strides = [1, 1]} : vector<8x96xf32> to vector<8x32xf32>
    %25 = vector.extract_strided_slice %21 {offsets = [0, 32], sizes = [8, 32], strides = [1, 1]} : vector<8x96xf32> to vector<8x32xf32>
    %26 = vector.extract_strided_slice %21 {offsets = [0, 64], sizes = [8, 32], strides = [1, 1]} : vector<8x96xf32> to vector<8x32xf32>
    %27 = arith.mulf %25, %9 : vector<8x32xf32>
    %28 = arith.mulf %24, %23 : vector<8x32xf32>
    %29 = arith.addf %27, %28 : vector<8x32xf32>
    %30 = math.tanh %29 : vector<8x32xf32>
    %31 = arith.mulf %26, %30 : vector<8x32xf32>
    %32 = arith.index_cast %11 : i32 to index
    %c0_14 = arith.constant 0 : index
    %33 = vector.load %arg10[%32, %c0_14] : memref<64x32xf32, #tpu.memory_space<vmem>>, vector<8x32xf32>
    tpu.vector_store %arg10[%32, %c0_14], %31 {strides = array<i32>} : memref<64x32xf32, #tpu.memory_space<vmem>>, vector<8x32xf32>,
    %c1_i32 = arith.constant 1 : i32
    %c8_i32_15 = arith.constant 8 : i32
    %34 = arith.muli %c1_i32, %c8_i32_15 : i32
    %35 = tpu.assume_multiple %34, 8 : i32
    %36 = arith.index_cast %35 : i32 to index
    %c0_16 = arith.constant 0 : index
    %37 = vector.load %arg9[%36, %c0_16] : memref<64x128xf32, #tpu.memory_space<vmem>>, vector<8x128xf32>
    %cst_17 = arith.constant dense<0.000000e+00> : vector<8x128xf32>
    %38 = tpu.matmul %31, %7, %cst_17 {dimension_numbers = #tpu.dot_dimension_numbers<[1], [0], [0], [1], [0, 0, 1, 1], [], []>} : vector<8x32xf32>, vector<32x128xf32>, vector<8x128xf32> -> vector<8x128xf32>
    %39 = arith.addf %37, %38 : vector<8x128xf32>
    %40 = vector.extract_strided_slice %39 {offsets = [0, 0], sizes = [8, 96], strides = [1, 1]} : vector<8x128xf32> to vector<8x96xf32>
    %41 = arith.negf %40 : vector<8x96xf32>
    %42 = math.exp %41 : vector<8x96xf32>
    %cst_18 = arith.constant 1.000000e+00 : f32
    %43 = vector.broadcast %cst_18 : f32 to vector<8x96xf32>
    %44 = arith.addf %43, %42 : vector<8x96xf32>
    %45 = arith.divf %43, %44 : vector<8x96xf32>
    %46 = vector.extract_strided_slice %39 {offsets = [0, 96], sizes = [8, 32], strides = [1, 1]} : vector<8x128xf32> to vector<8x32xf32>
    %47 = math.tanh %46 : vector<8x32xf32>
    %48 = vector.extract_strided_slice %45 {offsets = [0, 0], sizes = [8, 32], strides = [1, 1]} : vector<8x96xf32> to vector<8x32xf32>
    %49 = vector.extract_strided_slice %45 {offsets = [0, 32], sizes = [8, 32], strides = [1, 1]} : vector<8x96xf32> to vector<8x32xf32>
    %50 = vector.extract_strided_slice %45 {offsets = [0, 64], sizes = [8, 32], strides = [1, 1]} : vector<8x96xf32> to vector<8x32xf32>
    %51 = arith.mulf %49, %29 : vector<8x32xf32>
    %52 = arith.mulf %48, %47 : vector<8x32xf32>
    %53 = arith.addf %51, %52 : vector<8x32xf32>
    %54 = math.tanh %53 : vector<8x32xf32>
    %55 = arith.mulf %50, %54 : vector<8x32xf32>
    %56 = arith.index_cast %35 : i32 to index
    %c0_19 = arith.constant 0 : index
    %57 = vector.load %arg10[%56, %c0_19] : memref<64x32xf32, #tpu.memory_space<vmem>>, vector<8x32xf32>
    tpu.vector_store %arg10[%56, %c0_19], %55 {strides = array<i32>} : memref<64x32xf32, #tpu.memory_space<vmem>>, vector<8x32xf32>,
    %c2_i32 = arith.constant 2 : i32
    %c8_i32_20 = arith.constant 8 : i32
    %58 = arith.muli %c2_i32, %c8_i32_20 : i32
    %59 = tpu.assume_multiple %58, 8 : i32
    %60 = arith.index_cast %59 : i32 to index
    %c0_21 = arith.constant 0 : index
    %61 = vector.load %arg9[%60, %c0_21] : memref<64x128xf32, #tpu.memory_space<vmem>>, vector<8x128xf32>
    %cst_22 = arith.constant dense<0.000000e+00> : vector<8x128xf32>
    %62 = tpu.matmul %55, %7, %cst_22 {dimension_numbers = #tpu.dot_dimension_numbers<[1], [0], [0], [1], [0, 0, 1, 1], [], []>} : vector<8x32xf32>, vector<32x128xf32>, vector<8x128xf32> -> vector<8x128xf32>
    %63 = arith.addf %61, %62 : vector<8x128xf32>
    %64 = vector.extract_strided_slice %63 {offsets = [0, 0], sizes = [8, 96], strides = [1, 1]} : vector<8x128xf32> to vector<8x96xf32>
    %65 = arith.negf %64 : vector<8x96xf32>
    %66 = math.exp %65 : vector<8x96xf32>
    %cst_23 = arith.constant 1.000000e+00 : f32
    %67 = vector.broadcast %cst_23 : f32 to vector<8x96xf32>
    %68 = arith.addf %67, %66 : vector<8x96xf32>
    %69 = arith.divf %67, %68 : vector<8x96xf32>
    %70 = vector.extract_strided_slice %63 {offsets = [0, 96], sizes = [8, 32], strides = [1, 1]} : vector<8x128xf32> to vector<8x32xf32>
    %71 = math.tanh %70 : vector<8x32xf32>
    %72 = vector.extract_strided_slice %69 {offsets = [0, 0], sizes = [8, 32], strides = [1, 1]} : vector<8x96xf32> to vector<8x32xf32>
    %73 = vector.extract_strided_slice %69 {offsets = [0, 32], sizes = [8, 32], strides = [1, 1]} : vector<8x96xf32> to vector<8x32xf32>
    %74 = vector.extract_strided_slice %69 {offsets = [0, 64], sizes = [8, 32], strides = [1, 1]} : vector<8x96xf32> to vector<8x32xf32>
    %75 = arith.mulf %73, %53 : vector<8x32xf32>
    %76 = arith.mulf %72, %71 : vector<8x32xf32>
    %77 = arith.addf %75, %76 : vector<8x32xf32>
    %78 = math.tanh %77 : vector<8x32xf32>
    %79 = arith.mulf %74, %78 : vector<8x32xf32>
    %80 = arith.index_cast %59 : i32 to index
    %c0_24 = arith.constant 0 : index
    %81 = vector.load %arg10[%80, %c0_24] : memref<64x32xf32, #tpu.memory_space<vmem>>, vector<8x32xf32>
    tpu.vector_store %arg10[%80, %c0_24], %79 {strides = array<i32>} : memref<64x32xf32, #tpu.memory_space<vmem>>, vector<8x32xf32>,
    %c3_i32 = arith.constant 3 : i32
    %c8_i32_25 = arith.constant 8 : i32
    %82 = arith.muli %c3_i32, %c8_i32_25 : i32
    %83 = tpu.assume_multiple %82, 8 : i32
    %84 = arith.index_cast %83 : i32 to index
    %c0_26 = arith.constant 0 : index
    %85 = vector.load %arg9[%84, %c0_26] : memref<64x128xf32, #tpu.memory_space<vmem>>, vector<8x128xf32>
    %cst_27 = arith.constant dense<0.000000e+00> : vector<8x128xf32>
    %86 = tpu.matmul %79, %7, %cst_27 {dimension_numbers = #tpu.dot_dimension_numbers<[1], [0], [0], [1], [0, 0, 1, 1], [], []>} : vector<8x32xf32>, vector<32x128xf32>, vector<8x128xf32> -> vector<8x128xf32>
    %87 = arith.addf %85, %86 : vector<8x128xf32>
    %88 = vector.extract_strided_slice %87 {offsets = [0, 0], sizes = [8, 96], strides = [1, 1]} : vector<8x128xf32> to vector<8x96xf32>
    %89 = arith.negf %88 : vector<8x96xf32>
    %90 = math.exp %89 : vector<8x96xf32>
    %cst_28 = arith.constant 1.000000e+00 : f32
    %91 = vector.broadcast %cst_28 : f32 to vector<8x96xf32>
    %92 = arith.addf %91, %90 : vector<8x96xf32>
    %93 = arith.divf %91, %92 : vector<8x96xf32>
    %94 = vector.extract_strided_slice %87 {offsets = [0, 96], sizes = [8, 32], strides = [1, 1]} : vector<8x128xf32> to vector<8x32xf32>
    %95 = math.tanh %94 : vector<8x32xf32>
    %96 = vector.extract_strided_slice %93 {offsets = [0, 0], sizes = [8, 32], strides = [1, 1]} : vector<8x96xf32> to vector<8x32xf32>
    %97 = vector.extract_strided_slice %93 {offsets = [0, 32], sizes = [8, 32], strides = [1, 1]} : vector<8x96xf32> to vector<8x32xf32>
    %98 = vector.extract_strided_slice %93 {offsets = [0, 64], sizes = [8, 32], strides = [1, 1]} : vector<8x96xf32> to vector<8x32xf32>
    %99 = arith.mulf %97, %77 : vector<8x32xf32>
    %100 = arith.mulf %96, %95 : vector<8x32xf32>
    %101 = arith.addf %99, %100 : vector<8x32xf32>
    %102 = math.tanh %101 : vector<8x32xf32>
    %103 = arith.mulf %98, %102 : vector<8x32xf32>
    %104 = arith.index_cast %83 : i32 to index
    %c0_29 = arith.constant 0 : index
    %105 = vector.load %arg10[%104, %c0_29] : memref<64x32xf32, #tpu.memory_space<vmem>>, vector<8x32xf32>
    tpu.vector_store %arg10[%104, %c0_29], %103 {strides = array<i32>} : memref<64x32xf32, #tpu.memory_space<vmem>>, vector<8x32xf32>,
    %c4_i32 = arith.constant 4 : i32
    %c8_i32_30 = arith.constant 8 : i32
    %106 = arith.muli %c4_i32, %c8_i32_30 : i32
    %107 = tpu.assume_multiple %106, 8 : i32
    %108 = arith.index_cast %107 : i32 to index
    %c0_31 = arith.constant 0 : index
    %109 = vector.load %arg9[%108, %c0_31] : memref<64x128xf32, #tpu.memory_space<vmem>>, vector<8x128xf32>
    %cst_32 = arith.constant dense<0.000000e+00> : vector<8x128xf32>
    %110 = tpu.matmul %103, %7, %cst_32 {dimension_numbers = #tpu.dot_dimension_numbers<[1], [0], [0], [1], [0, 0, 1, 1], [], []>} : vector<8x32xf32>, vector<32x128xf32>, vector<8x128xf32> -> vector<8x128xf32>
    %111 = arith.addf %109, %110 : vector<8x128xf32>
    %112 = vector.extract_strided_slice %111 {offsets = [0, 0], sizes = [8, 96], strides = [1, 1]} : vector<8x128xf32> to vector<8x96xf32>
    %113 = arith.negf %112 : vector<8x96xf32>
    %114 = math.exp %113 : vector<8x96xf32>
    %cst_33 = arith.constant 1.000000e+00 : f32
    %115 = vector.broadcast %cst_33 : f32 to vector<8x96xf32>
    %116 = arith.addf %115, %114 : vector<8x96xf32>
    %117 = arith.divf %115, %116 : vector<8x96xf32>
    %118 = vector.extract_strided_slice %111 {offsets = [0, 96], sizes = [8, 32], strides = [1, 1]} : vector<8x128xf32> to vector<8x32xf32>
    %119 = math.tanh %118 : vector<8x32xf32>
    %120 = vector.extract_strided_slice %117 {offsets = [0, 0], sizes = [8, 32], strides = [1, 1]} : vector<8x96xf32> to vector<8x32xf32>
    %121 = vector.extract_strided_slice %117 {offsets = [0, 32], sizes = [8, 32], strides = [1, 1]} : vector<8x96xf32> to vector<8x32xf32>
    %122 = vector.extract_strided_slice %117 {offsets = [0, 64], sizes = [8, 32], strides = [1, 1]} : vector<8x96xf32> to vector<8x32xf32>
    %123 = arith.mulf %121, %101 : vector<8x32xf32>
    %124 = arith.mulf %120, %119 : vector<8x32xf32>
    %125 = arith.addf %123, %124 : vector<8x32xf32>
    %126 = math.tanh %125 : vector<8x32xf32>
    %127 = arith.mulf %122, %126 : vector<8x32xf32>
    %128 = arith.index_cast %107 : i32 to index
    %c0_34 = arith.constant 0 : index
    %129 = vector.load %arg10[%128, %c0_34] : memref<64x32xf32, #tpu.memory_space<vmem>>, vector<8x32xf32>
    tpu.vector_store %arg10[%128, %c0_34], %127 {strides = array<i32>} : memref<64x32xf32, #tpu.memory_space<vmem>>, vector<8x32xf32>,
    %c5_i32 = arith.constant 5 : i32
    %c8_i32_35 = arith.constant 8 : i32
    %130 = arith.muli %c5_i32, %c8_i32_35 : i32
    %131 = tpu.assume_multiple %130, 8 : i32
    %132 = arith.index_cast %131 : i32 to index
    %c0_36 = arith.constant 0 : index
    %133 = vector.load %arg9[%132, %c0_36] : memref<64x128xf32, #tpu.memory_space<vmem>>, vector<8x128xf32>
    %cst_37 = arith.constant dense<0.000000e+00> : vector<8x128xf32>
    %134 = tpu.matmul %127, %7, %cst_37 {dimension_numbers = #tpu.dot_dimension_numbers<[1], [0], [0], [1], [0, 0, 1, 1], [], []>} : vector<8x32xf32>, vector<32x128xf32>, vector<8x128xf32> -> vector<8x128xf32>
    %135 = arith.addf %133, %134 : vector<8x128xf32>
    %136 = vector.extract_strided_slice %135 {offsets = [0, 0], sizes = [8, 96], strides = [1, 1]} : vector<8x128xf32> to vector<8x96xf32>
    %137 = arith.negf %136 : vector<8x96xf32>
    %138 = math.exp %137 : vector<8x96xf32>
    %cst_38 = arith.constant 1.000000e+00 : f32
    %139 = vector.broadcast %cst_38 : f32 to vector<8x96xf32>
    %140 = arith.addf %139, %138 : vector<8x96xf32>
    %141 = arith.divf %139, %140 : vector<8x96xf32>
    %142 = vector.extract_strided_slice %135 {offsets = [0, 96], sizes = [8, 32], strides = [1, 1]} : vector<8x128xf32> to vector<8x32xf32>
    %143 = math.tanh %142 : vector<8x32xf32>
    %144 = vector.extract_strided_slice %141 {offsets = [0, 0], sizes = [8, 32], strides = [1, 1]} : vector<8x96xf32> to vector<8x32xf32>
    %145 = vector.extract_strided_slice %141 {offsets = [0, 32], sizes = [8, 32], strides = [1, 1]} : vector<8x96xf32> to vector<8x32xf32>
    %146 = vector.extract_strided_slice %141 {offsets = [0, 64], sizes = [8, 32], strides = [1, 1]} : vector<8x96xf32> to vector<8x32xf32>
    %147 = arith.mulf %145, %125 : vector<8x32xf32>
    %148 = arith.mulf %144, %143 : vector<8x32xf32>
    %149 = arith.addf %147, %148 : vector<8x32xf32>
    %150 = math.tanh %149 : vector<8x32xf32>
    %151 = arith.mulf %146, %150 : vector<8x32xf32>
    %152 = arith.index_cast %131 : i32 to index
    %c0_39 = arith.constant 0 : index
    %153 = vector.load %arg10[%152, %c0_39] : memref<64x32xf32, #tpu.memory_space<vmem>>, vector<8x32xf32>
    tpu.vector_store %arg10[%152, %c0_39], %151 {strides = array<i32>} : memref<64x32xf32, #tpu.memory_space<vmem>>, vector<8x32xf32>,
    %c6_i32 = arith.constant 6 : i32
    %c8_i32_40 = arith.constant 8 : i32
    %154 = arith.muli %c6_i32, %c8_i32_40 : i32
    %155 = tpu.assume_multiple %154, 8 : i32
    %156 = arith.index_cast %155 : i32 to index
    %c0_41 = arith.constant 0 : index
    %157 = vector.load %arg9[%156, %c0_41] : memref<64x128xf32, #tpu.memory_space<vmem>>, vector<8x128xf32>
    %cst_42 = arith.constant dense<0.000000e+00> : vector<8x128xf32>
    %158 = tpu.matmul %151, %7, %cst_42 {dimension_numbers = #tpu.dot_dimension_numbers<[1], [0], [0], [1], [0, 0, 1, 1], [], []>} : vector<8x32xf32>, vector<32x128xf32>, vector<8x128xf32> -> vector<8x128xf32>
    %159 = arith.addf %157, %158 : vector<8x128xf32>
    %160 = vector.extract_strided_slice %159 {offsets = [0, 0], sizes = [8, 96], strides = [1, 1]} : vector<8x128xf32> to vector<8x96xf32>
    %161 = arith.negf %160 : vector<8x96xf32>
    %162 = math.exp %161 : vector<8x96xf32>
    %cst_43 = arith.constant 1.000000e+00 : f32
    %163 = vector.broadcast %cst_43 : f32 to vector<8x96xf32>
    %164 = arith.addf %163, %162 : vector<8x96xf32>
    %165 = arith.divf %163, %164 : vector<8x96xf32>
    %166 = vector.extract_strided_slice %159 {offsets = [0, 96], sizes = [8, 32], strides = [1, 1]} : vector<8x128xf32> to vector<8x32xf32>
    %167 = math.tanh %166 : vector<8x32xf32>
    %168 = vector.extract_strided_slice %165 {offsets = [0, 0], sizes = [8, 32], strides = [1, 1]} : vector<8x96xf32> to vector<8x32xf32>
    %169 = vector.extract_strided_slice %165 {offsets = [0, 32], sizes = [8, 32], strides = [1, 1]} : vector<8x96xf32> to vector<8x32xf32>
    %170 = vector.extract_strided_slice %165 {offsets = [0, 64], sizes = [8, 32], strides = [1, 1]} : vector<8x96xf32> to vector<8x32xf32>
    %171 = arith.mulf %169, %149 : vector<8x32xf32>
    %172 = arith.mulf %168, %167 : vector<8x32xf32>
    %173 = arith.addf %171, %172 : vector<8x32xf32>
    %174 = math.tanh %173 : vector<8x32xf32>
    %175 = arith.mulf %170, %174 : vector<8x32xf32>
    %176 = arith.index_cast %155 : i32 to index
    %c0_44 = arith.constant 0 : index
    %177 = vector.load %arg10[%176, %c0_44] : memref<64x32xf32, #tpu.memory_space<vmem>>, vector<8x32xf32>
    tpu.vector_store %arg10[%176, %c0_44], %175 {strides = array<i32>} : memref<64x32xf32, #tpu.memory_space<vmem>>, vector<8x32xf32>,
    %c7_i32 = arith.constant 7 : i32
    %c8_i32_45 = arith.constant 8 : i32
    %178 = arith.muli %c7_i32, %c8_i32_45 : i32
    %179 = tpu.assume_multiple %178, 8 : i32
    %180 = arith.index_cast %179 : i32 to index
    %c0_46 = arith.constant 0 : index
    %181 = vector.load %arg9[%180, %c0_46] : memref<64x128xf32, #tpu.memory_space<vmem>>, vector<8x128xf32>
    %cst_47 = arith.constant dense<0.000000e+00> : vector<8x128xf32>
    %182 = tpu.matmul %175, %7, %cst_47 {dimension_numbers = #tpu.dot_dimension_numbers<[1], [0], [0], [1], [0, 0, 1, 1], [], []>} : vector<8x32xf32>, vector<32x128xf32>, vector<8x128xf32> -> vector<8x128xf32>
    %183 = arith.addf %181, %182 : vector<8x128xf32>
    %184 = vector.extract_strided_slice %183 {offsets = [0, 0], sizes = [8, 96], strides = [1, 1]} : vector<8x128xf32> to vector<8x96xf32>
    %185 = arith.negf %184 : vector<8x96xf32>
    %186 = math.exp %185 : vector<8x96xf32>
    %cst_48 = arith.constant 1.000000e+00 : f32
    %187 = vector.broadcast %cst_48 : f32 to vector<8x96xf32>
    %188 = arith.addf %187, %186 : vector<8x96xf32>
    %189 = arith.divf %187, %188 : vector<8x96xf32>
    %190 = vector.extract_strided_slice %183 {offsets = [0, 96], sizes = [8, 32], strides = [1, 1]} : vector<8x128xf32> to vector<8x32xf32>
    %191 = math.tanh %190 : vector<8x32xf32>
    %192 = vector.extract_strided_slice %189 {offsets = [0, 0], sizes = [8, 32], strides = [1, 1]} : vector<8x96xf32> to vector<8x32xf32>
    %193 = vector.extract_strided_slice %189 {offsets = [0, 32], sizes = [8, 32], strides = [1, 1]} : vector<8x96xf32> to vector<8x32xf32>
    %194 = vector.extract_strided_slice %189 {offsets = [0, 64], sizes = [8, 32], strides = [1, 1]} : vector<8x96xf32> to vector<8x32xf32>
    %195 = arith.mulf %193, %173 : vector<8x32xf32>
    %196 = arith.mulf %192, %191 : vector<8x32xf32>
    %197 = arith.addf %195, %196 : vector<8x32xf32>
    %198 = math.tanh %197 : vector<8x32xf32>
    %199 = arith.mulf %194, %198 : vector<8x32xf32>
    %200 = arith.index_cast %179 : i32 to index
    %c0_49 = arith.constant 0 : index
    %201 = vector.load %arg10[%200, %c0_49] : memref<64x32xf32, #tpu.memory_space<vmem>>, vector<8x32xf32>
    tpu.vector_store %arg10[%200, %c0_49], %199 {strides = array<i32>} : memref<64x32xf32, #tpu.memory_space<vmem>>, vector<8x32xf32>,
    %c8_i32_50 = arith.constant 8 : i32
    %c0_51 = arith.constant 0 : index
    %c0_52 = arith.constant 0 : index
    %c0_53 = arith.constant 0 : index
    %202 = vector.load %arg7[%c0_51, %c0_52, %c0_53] : memref<1x8x32xf32, #tpu.memory_space<vmem>>, vector<1x8x32xf32>
    %203 = vector.shape_cast %202 : vector<1x8x32xf32> to vector<8x32xf32>
    %204 = vector.shape_cast %199 : vector<8x32xf32> to vector<1x8x32xf32>
    tpu.vector_store %arg7[%c0_51, %c0_52, %c0_53], %204 {strides = array<i32>} : memref<1x8x32xf32, #tpu.memory_space<vmem>>, vector<1x8x32xf32>,
    %c0_54 = arith.constant 0 : index
    %c0_55 = arith.constant 0 : index
    %c0_56 = arith.constant 0 : index
    %205 = vector.load %arg8[%c0_54, %c0_55, %c0_56] : memref<1x8x32xf32, #tpu.memory_space<vmem>>, vector<1x8x32xf32>
    %206 = vector.shape_cast %205 : vector<1x8x32xf32> to vector<8x32xf32>
    %207 = vector.shape_cast %197 : vector<8x32xf32> to vector<1x8x32xf32>
    tpu.vector_store %arg8[%c0_54, %c0_55, %c0_56], %207 {strides = array<i32>} : memref<1x8x32xf32, #tpu.memory_space<vmem>>, vector<1x8x32xf32>,
    %c0_57 = arith.constant 0 : index
    %c0_58 = arith.constant 0 : index
    %208 = vector.load %arg10[%c0_57, %c0_58] : memref<64x32xf32, #tpu.memory_space<vmem>>, vector<64x32xf32>
    %c0_59 = arith.constant 0 : index
    %c0_60 = arith.constant 0 : index
    %209 = vector.load %arg4[%c0_59, %c0_60] : memref<32x128xf32, #tpu.memory_space<vmem>>, vector<32x128xf32>
    %cst_61 = arith.constant dense<0.000000e+00> : vector<64x128xf32>
    %210 = tpu.matmul %208, %209, %cst_61 {dimension_numbers = #tpu.dot_dimension_numbers<[1], [0], [0], [1], [0, 0, 1, 1], [], []>} : vector<64x32xf32>, vector<32x128xf32>, vector<64x128xf32> -> vector<64x128xf32>
    %c0_62 = arith.constant 0 : index
    %c0_63 = arith.constant 0 : index
    %211 = vector.load %arg5[%c0_62, %c0_63] : memref<1x128xf32, #tpu.memory_space<vmem>>, vector<1x128xf32>
    %212 = vector.broadcast %211 : vector<1x128xf32> to vector<64x128xf32>
    %213 = arith.addf %210, %212 : vector<64x128xf32>
    %c0_64 = arith.constant 0 : index
    %c0_65 = arith.constant 0 : index
    %214 = vector.load %arg6[%c0_64, %c0_65] : memref<64x128xf32, #tpu.memory_space<vmem>>, vector<64x128xf32>
    tpu.vector_store %arg6[%c0_64, %c0_65], %213 {strides = array<i32>} : memref<64x128xf32, #tpu.memory_space<vmem>>, vector<64x128xf32>,
    return
  }
}

</mosaic_0001>

<llo_original>
// kernel: tpu_custom_call.1
$region0: #{tpu_custom_call.1}
  #allocation0 [shape = 'u32[]', space=smem, size = 0x4, offset = 0x4, fixed_abs, tag = 'smem constant byte address 0x4 - core index']
  #allocation1 [shape = 'u32[72,128]{1,0:T(1,128)}', space=vmem, size = 0x9000, scoped, tag = 'internal scratch']
  #allocation2 [shape = 'f32[64,128]{1,0:T(8,128)}', space=vmem, size = 0x8000, scoped, tag = 'scratch operand']
  #allocation3 [shape = 'f32[64,32]{1,0:T(8,128)}', space=vmem, size = 0x8000, scoped, tag = 'scratch operand']
  %s0 = inlined_call_operand.vmem [shape: f32[64,4], index: 0, kind: input, shape index: {}]
  %s1 = inlined_call_operand.vmem [shape: f32[4,128], index: 1, kind: input, shape index: {}]
  %s2 = inlined_call_operand.vmem [shape: f32[1,128], index: 2, kind: input, shape index: {}]
  %s3 = inlined_call_operand.vmem [shape: f32[32,128], index: 3, kind: input, shape index: {}]
  %s4 = inlined_call_operand.vmem [shape: f32[32,128], index: 4, kind: input, shape index: {}]
  %s5 = inlined_call_operand.vmem [shape: f32[1,128], index: 5, kind: input, shape index: {}]
  %s6 = inlined_call_operand.hbm [shape: f32[64,128], index: 6, kind: output, shape index: {0}]
  %s7 = inlined_call_operand.hbm [shape: f32[1,8,32], index: 7, kind: output, shape index: {1}]
  %s8 = inlined_call_operand.hbm [shape: f32[1,8,32], index: 8, kind: output, shape index: {2}]
  %9 = xla_tuple %s6, %s7, %s8
  %s10 = sld [smem:[#allocation0]]
  $region50: #{tpu_custom_call.1} parent=0
    _
  %s12 = ssub.s32 1, %s10
  %s13 = scalar_select 0, %s12, %s10
  $region1: #{tpu_custom_call.1} parent=0
    #allocation4 [shape = 'u8[32768]{0}', space=vmem, size = 0x8000, scoped, tag = 'output window, operand 0, single buffered']
    #allocation5 [shape = 's32[1]{0}', space=sflag, size = 0x4, scoped, tag = 'scoped memory for tpu_custom_call.1']
    #allocation6 [shape = 'u8[4096]{0}', space=vmem, size = 0x1000, scoped, tag = 'output window, operand 1, single buffered']
    #allocation7 [shape = 's32[1]{0}', space=sflag, size = 0x4, scoped, tag = 'scoped memory for tpu_custom_call.1']
    #allocation8 [shape = 'u8[4096]{0}', space=vmem, size = 0x1000, scoped, tag = 'output window, operand 2, single buffered']
    %14 = vsyncpa [#allocation5], 0
    %15 = vsyncpa [#allocation7], 0
    // Predicated region
    $region2: #{tpu_custom_call.1} parent=1 // pred_check
      _
    $region3: #{tpu_custom_call.1} parent=1 // pred_check_branch
      %17 = sbr.rel (0) target = $region5
    $region4: #{tpu_custom_call.1} parent=1 // pred_region
      _
    $region5: #{tpu_custom_call.1} parent=1 // pred_fallthru
      _
    // Predicated region
    $region6: #{tpu_custom_call.1} parent=1 // pred_check
      _
    $region7: #{tpu_custom_call.1} parent=1 // pred_check_branch
      %19 = sbr.rel (0) target = $region9
    $region8: #{tpu_custom_call.1} parent=1 // pred_region
      _
    $region9: #{tpu_custom_call.1} parent=1 // pred_fallthru
      _
    // Predicated region
    $region10: #{tpu_custom_call.1} parent=1 // pred_check
      _
    $region11: #{tpu_custom_call.1} parent=1 // pred_check_branch
      %21 = sbr.rel (0) target = $region13
    $region12: #{tpu_custom_call.1} parent=1 // pred_region
      _
    $region13: #{tpu_custom_call.1} parent=1 // pred_fallthru
      _
    // Predicated region
    $region14: #{tpu_custom_call.1} parent=1 // pred_check
      _
    $region15: #{tpu_custom_call.1} parent=1 // pred_check_branch
      %23 = sbr.rel (0) target = $region17
    $region16: #{tpu_custom_call.1} parent=1 // pred_region
      _
    $region17: #{tpu_custom_call.1} parent=1 // pred_fallthru
      _
    // Predicated region
    $region18: #{tpu_custom_call.1} parent=1 // pred_check
      _
    $region19: #{tpu_custom_call.1} parent=1 // pred_check_branch
      %25 = sbr.rel (0) target = $region21
    $region20: #{tpu_custom_call.1} parent=1 // pred_region
      _
    $region21: #{tpu_custom_call.1} parent=1 // pred_fallthru
      _
    // Predicated region
    $region22: #{tpu_custom_call.1} parent=1 // pred_check
      _
    $region23: #{tpu_custom_call.1} parent=1 // pred_check_branch
      %27 = sbr.rel (0) target = $region25
    $region24: #{tpu_custom_call.1} parent=1 // pred_region
      _
    $region25: #{tpu_custom_call.1} parent=1 // pred_fallthru
      _
    %v28 = vld [vmem:[%s0] sm:$0xff]
    %v29 = vld [vmem:[%s0 + $0x8] sm:$0xff]
    %v30 = vld [vmem:[%s0 + $0x10] sm:$0xff]
    %v31 = vld [vmem:[%s0 + $0x18] sm:$0xff]
    %v32 = vld [vmem:[%s0 + $0x20] sm:$0xff]
    %v33 = vld [vmem:[%s0 + $0x28] sm:$0xff]
    %v34 = vld [vmem:[%s0 + $0x30] sm:$0xff]
    %v35 = vld [vmem:[%s0 + $0x38] sm:$0xff]
    %v36 = vld [vmem:[%s1] sm:$0xf]
    %v37 = vld [vmem:[%s2] sm:$0x1]
    %v39 = vperm.slane %v37, 0
    %vm41 = vcmask 31744
    %v43 = vsel %vm41, %v28, 0
    %v46 = vsel %vm41, %v29, 0
    %v49 = vsel %vm41, %v30, 0
    %v52 = vsel %vm41, %v31, 0
    %v55 = vsel %vm41, %v32, 0
    %v58 = vsel %vm41, %v33, 0
    %v61 = vsel %vm41, %v34, 0
    %v64 = vsel %vm41, %v35, 0
    %vm66 = vcmask 1043456
    %v68 = vsel %vm66, %v36, 0
    %70 = vmatpush.msra.mxu0 0.0
    %71 = vmatpush.msra.mxu0 0.0
    %72 = vmatpush.msra.mxu0 0.0
    %73 = vmatpush.msra.mxu0 0.0
    %74 = vmatpush.msra.mxu0 0.0
    %75 = vmatpush.msra.mxu0 0.0
    %76 = vmatpush.msra.mxu0 0.0
    %77 = vmatpush.msra.mxu0 0.0
    %78 = vmatpush.msra.mxu0 0.0
    %79 = vmatpush.msra.mxu0 0.0
    %80 = vmatpush.msra.mxu0 0.0
    %81 = vmatpush.msra.mxu0 0.0
    %82 = vmatpush.msra.mxu0 0.0
    %83 = vmatpush.msra.mxu0 0.0
    %84 = vmatpush.msra.mxu0 0.0
    %85 = vmatpush.msra.mxu0 %v68
    %86 = vmatmul.f32.gmra.mxu0 %v43
    %v87 = vpop.f32.mrf.mxu0
    %v88 = vadd.f32 %v39, %v87
    %89 = vmatmul.f32.gmra.mxu0 %v46
    %v90 = vpop.f32.mrf.mxu0
    %v91 = vadd.f32 %v39, %v90
    %92 = vmatmul.f32.gmra.mxu0 %v49
    %v93 = vpop.f32.mrf.mxu0
    %v94 = vadd.f32 %v39, %v93
    %95 = vmatmul.f32.gmra.mxu0 %v52
    %v96 = vpop.f32.mrf.mxu0
    %v97 = vadd.f32 %v39, %v96
    %98 = vmatmul.f32.gmra.mxu0 %v55
    %v99 = vpop.f32.mrf.mxu0
    %v100 = vadd.f32 %v39, %v99
    %101 = vmatmul.f32.gmra.mxu0 %v58
    %v102 = vpop.f32.mrf.mxu0
    %v103 = vadd.f32 %v39, %v102
    %104 = vmatmul.f32.gmra.mxu0 %v61
    %v105 = vpop.f32.mrf.mxu0
    %v106 = vadd.f32 %v39, %v105
    %107 = vmatmul.f32.gmra.mxu0 %v64
    %v108 = vpop.f32.mrf.mxu0
    %v109 = vadd.f32 %v39, %v108
    %110 = vdwg.mxu0
    %111 = vst [vmem:[#allocation2] sm:$0xff] %v88
    %112 = vst [vmem:[#allocation2 + $0x8] sm:$0xff] %v91
    %113 = vst [vmem:[#allocation2 + $0x10] sm:$0xff] %v94
    %114 = vst [vmem:[#allocation2 + $0x18] sm:$0xff] %v97
    %115 = vst [vmem:[#allocation2 + $0x20] sm:$0xff] %v100
    %116 = vst [vmem:[#allocation2 + $0x28] sm:$0xff] %v103
    %117 = vst [vmem:[#allocation2 + $0x30] sm:$0xff] %v106
    %118 = vst [vmem:[#allocation2 + $0x38] sm:$0xff] %v109
    %v119 = vld [vmem:[%s3] sm:$0xff]
    %v120 = vld [vmem:[%s3 + $0x8] sm:$0xff]
    %v121 = vld [vmem:[%s3 + $0x10] sm:$0xff]
    %v122 = vld [vmem:[%s3 + $0x18] sm:$0xff]
    %v123 = vld [vmem:[#allocation2] sm:$0xff]
    %vm124 = vcmask 261120
    %v126 = vsel %vm124, 0.0, 0
    %128 = vmatpush.msra.mxu0 0.0
    %129 = vmatpush.msra.mxu0 0.0
    %130 = vmatpush.msra.mxu0 0.0
    %131 = vmatpush.msra.mxu0 0.0
    %132 = vmatpush.msra.mxu0 0.0
    %133 = vmatpush.msra.mxu0 0.0
    %134 = vmatpush.msra.mxu0 0.0
    %135 = vmatpush.msra.mxu0 0.0
    %136 = vmatpush.msra.mxu0 0.0
    %137 = vmatpush.msra.mxu0 0.0
    %138 = vmatpush.msra.mxu0 0.0
    %139 = vmatpush.msra.mxu0 0.0
    %140 = vmatpush.msra.mxu0 %v122
    %141 = vmatpush.msra.mxu0 %v121
    %142 = vmatpush.msra.mxu0 %v120
    %143 = vmatpush.msra.mxu0 %v119
    %144 = vmatmul.f32.gmra.mxu0 %v126
    %v145 = vpop.f32.mrf.mxu0
    %v146 = vadd.f32 0.0, %v145
    %147 = vdwg.mxu0
    %v148 = vadd.f32 %v123, %v146
    %v149 = vxor.u32 %v148, 2147483648
    %v150 = vmul.f32 %v149, 1.442695
    %v151 = vpow.pop %v150
    %v152 = vadd.f32 %v151, 1.0
    %v153 = vrcp.pop %v152
    %v154 = vmul.f32 %v152, %v153
    %v155 = vsub.f32 1.0, %v154
    %v156 = vmul.f32 %v153, %v155
    %v157 = vadd.f32 %v153, %v156
    %vm158 = vweird.f32 %v152
    %vm159 = vweird.f32 %v153
    %vm160 = vmor %vm158, %vm159
    %v161 = vsel %vm160, %v153, %v157
    %v162 = vand.u32 2147483647, %v152
    %vm163 = vcmp.eq.f32.partialorder %v162, 8.507059e+37
    %v164 = vand.u32 %v152, 2147483648
    %v165 = vor.u32 1.1754944e-38, %v164
    %v166 = vsel %vm163, %v165, %v161
    %v167 = vmul.f32 1.0, %v166
    %v168 = vtanh.pop %v148
    %v169 = vmul.f32 %v167, 0.0
    %171 = vrot.lane.b32.xlu0 %v168, 32
    %v172 = vpop.permute.xlu0 %171
    %v174 = vmul.f32 %v167, %v172
    %176 = vrot.lane.b32.xlu0 %v174, 32
    %v177 = vpop.permute.xlu0 %176
    %v179 = vadd.f32 %v169, %v177
    %v180 = vtanh.pop %v179
    %182 = vrot.lane.b32.xlu0 %v180, 32
    %v183 = vpop.permute.xlu0 %182
    %v185 = vmul.f32 %v167, %v183
    %187 = vrot.lane.b32.xlu0 %v185, 64
    %v188 = vpop.permute.xlu0 %187
    %190 = vst.msk [vmem:[#allocation3] sm:$0xff] %vm124, %v188
    %s191 = scalar_lea.vmem [#allocation2], 8
    %v192 = vld [vmem:[%s191] sm:$0xff]
    %v193 = vsel %vm124, %v188, 0
    %195 = vmatpush.msra.mxu0 0.0
    %196 = vmatpush.msra.mxu0 0.0
    %197 = vmatpush.msra.mxu0 0.0
    %198 = vmatpush.msra.mxu0 0.0
    %199 = vmatpush.msra.mxu0 0.0
    %200 = vmatpush.msra.mxu0 0.0
    %201 = vmatpush.msra.mxu0 0.0
    %202 = vmatpush.msra.mxu0 0.0
    %203 = vmatpush.msra.mxu0 0.0
    %204 = vmatpush.msra.mxu0 0.0
    %205 = vmatpush.msra.mxu0 0.0
    %206 = vmatpush.msra.mxu0 0.0
    %207 = vmatpush.msra.mxu0 %v122
    %208 = vmatpush.msra.mxu0 %v121
    %209 = vmatpush.msra.mxu0 %v120
    %210 = vmatpush.msra.mxu0 %v119
    %211 = vmatmul.f32.gmra.mxu0 %v193
    %v212 = vpop.f32.mrf.mxu0
    %v213 = vadd.f32 0.0, %v212
    %214 = vdwg.mxu0
    %v215 = vadd.f32 %v192, %v213
    %v216 = vxor.u32 %v215, 2147483648
    %v217 = vmul.f32 %v216, 1.442695
    %v218 = vpow.pop %v217
    %v219 = vadd.f32 %v218, 1.0
    %v220 = vrcp.pop %v219
    %v221 = vmul.f32 %v219, %v220
    %v222 = vsub.f32 1.0, %v221
    %v223 = vmul.f32 %v220, %v222
    %v224 = vadd.f32 %v220, %v223
    %vm225 = vweird.f32 %v219
    %vm226 = vweird.f32 %v220
    %vm227 = vmor %vm225, %vm226
    %v228 = vsel %vm227, %v220, %v224
    %v229 = vand.u32 2147483647, %v219
    %vm230 = vcmp.eq.f32.partialorder %v229, 8.507059e+37
    %v231 = vand.u32 %v219, 2147483648
    %v232 = vor.u32 1.1754944e-38, %v231
    %v233 = vsel %vm230, %v232, %v228
    %v234 = vmul.f32 1.0, %v233
    %v235 = vtanh.pop %v215
    %v236 = vmul.f32 %v234, %v179
    %238 = vrot.lane.b32.xlu0 %v235, 32
    %v239 = vpop.permute.xlu0 %238
    %v241 = vmul.f32 %v234, %v239
    %243 = vrot.lane.b32.xlu0 %v241, 32
    %v244 = vpop.permute.xlu0 %243
    %v246 = vadd.f32 %v236, %v244
    %v247 = vtanh.pop %v246
    %249 = vrot.lane.b32.xlu0 %v247, 32
    %v250 = vpop.permute.xlu0 %249
    %v252 = vmul.f32 %v234, %v250
    %254 = vrot.lane.b32.xlu0 %v252, 64
    %v255 = vpop.permute.xlu0 %254
    %s257 = scalar_lea.vmem [#allocation3], 8
    %258 = vst.msk [vmem:[%s257] sm:$0xff] %vm124, %v255
    %s259 = scalar_lea.vmem [#allocation2], 16
    %v260 = vld [vmem:[%s259] sm:$0xff]
    %v261 = vsel %vm124, %v255, 0
    %263 = vmatpush.msra.mxu0 0.0
    %264 = vmatpush.msra.mxu0 0.0
    %265 = vmatpush.msra.mxu0 0.0
    %266 = vmatpush.msra.mxu0 0.0
    %267 = vmatpush.msra.mxu0 0.0
    %268 = vmatpush.msra.mxu0 0.0
    %269 = vmatpush.msra.mxu0 0.0
    %270 = vmatpush.msra.mxu0 0.0
    %271 = vmatpush.msra.mxu0 0.0
    %272 = vmatpush.msra.mxu0 0.0
    %273 = vmatpush.msra.mxu0 0.0
    %274 = vmatpush.msra.mxu0 0.0
    %275 = vmatpush.msra.mxu0 %v122
    %276 = vmatpush.msra.mxu0 %v121
    %277 = vmatpush.msra.mxu0 %v120
    %278 = vmatpush.msra.mxu0 %v119
    %279 = vmatmul.f32.gmra.mxu0 %v261
    %v280 = vpop.f32.mrf.mxu0
    %v281 = vadd.f32 0.0, %v280
    %282 = vdwg.mxu0
    %v283 = vadd.f32 %v260, %v281
    %v284 = vxor.u32 %v283, 2147483648
    %v285 = vmul.f32 %v284, 1.442695
    %v286 = vpow.pop %v285
    %v287 = vadd.f32 %v286, 1.0
    %v288 = vrcp.pop %v287
    %v289 = vmul.f32 %v287, %v288
    %v290 = vsub.f32 1.0, %v289
    %v291 = vmul.f32 %v288, %v290
    %v292 = vadd.f32 %v288, %v291
    %vm293 = vweird.f32 %v287
    %vm294 = vweird.f32 %v288
    %vm295 = vmor %vm293, %vm294
    %v296 = vsel %vm295, %v288, %v292
    %v297 = vand.u32 2147483647, %v287
    %vm298 = vcmp.eq.f32.partialorder %v297, 8.507059e+37
    %v299 = vand.u32 %v287, 2147483648
    %v300 = vor.u32 1.1754944e-38, %v299
    %v301 = vsel %vm298, %v300, %v296
    %v302 = vmul.f32 1.0, %v301
    %v303 = vtanh.pop %v283
    %v304 = vmul.f32 %v302, %v246
    %306 = vrot.lane.b32.xlu0 %v303, 32
    %v307 = vpop.permute.xlu0 %306
    %v309 = vmul.f32 %v302, %v307
    %311 = vrot.lane.b32.xlu0 %v309, 32
    %v312 = vpop.permute.xlu0 %311
    %v314 = vadd.f32 %v304, %v312
    %v315 = vtanh.pop %v314
    %317 = vrot.lane.b32.xlu0 %v315, 32
    %v318 = vpop.permute.xlu0 %317
    %v320 = vmul.f32 %v302, %v318
    %322 = vrot.lane.b32.xlu0 %v320, 64
    %v323 = vpop.permute.xlu0 %322
    %s325 = scalar_lea.vmem [#allocation3], 16
    %326 = vst.msk [vmem:[%s325] sm:$0xff] %vm124, %v323
    %s327 = scalar_lea.vmem [#allocation2], 24
    %v328 = vld [vmem:[%s327] sm:$0xff]
    %v329 = vsel %vm124, %v323, 0
    %331 = vmatpush.msra.mxu0 0.0
    %332 = vmatpush.msra.mxu0 0.0
    %333 = vmatpush.msra.mxu0 0.0
    %334 = vmatpush.msra.mxu0 0.0
    %335 = vmatpush.msra.mxu0 0.0
    %336 = vmatpush.msra.mxu0 0.0
    %337 = vmatpush.msra.mxu0 0.0
    %338 = vmatpush.msra.mxu0 0.0
    %339 = vmatpush.msra.mxu0 0.0
    %340 = vmatpush.msra.mxu0 0.0
    %341 = vmatpush.msra.mxu0 0.0
    %342 = vmatpush.msra.mxu0 0.0
    %343 = vmatpush.msra.mxu0 %v122
    %344 = vmatpush.msra.mxu0 %v121
    %345 = vmatpush.msra.mxu0 %v120
    %346 = vmatpush.msra.mxu0 %v119
    %347 = vmatmul.f32.gmra.mxu0 %v329
    %v348 = vpop.f32.mrf.mxu0
    %v349 = vadd.f32 0.0, %v348
    %350 = vdwg.mxu0
    %v351 = vadd.f32 %v328, %v349
    %v352 = vxor.u32 %v351, 2147483648
    %v353 = vmul.f32 %v352, 1.442695
    %v354 = vpow.pop %v353
    %v355 = vadd.f32 %v354, 1.0
    %v356 = vrcp.pop %v355
    %v357 = vmul.f32 %v355, %v356
    %v358 = vsub.f32 1.0, %v357
    %v359 = vmul.f32 %v356, %v358
    %v360 = vadd.f32 %v356, %v359
    %vm361 = vweird.f32 %v355
    %vm362 = vweird.f32 %v356
    %vm363 = vmor %vm361, %vm362
    %v364 = vsel %vm363, %v356, %v360
    %v365 = vand.u32 2147483647, %v355
    %vm366 = vcmp.eq.f32.partialorder %v365, 8.507059e+37
    %v367 = vand.u32 %v355, 2147483648
    %v368 = vor.u32 1.1754944e-38, %v367
    %v369 = vsel %vm366, %v368, %v364
    %v370 = vmul.f32 1.0, %v369
    %v371 = vtanh.pop %v351
    %v372 = vmul.f32 %v370, %v314
    %374 = vrot.lane.b32.xlu0 %v371, 32
    %v375 = vpop.permute.xlu0 %374
    %v377 = vmul.f32 %v370, %v375
    %379 = vrot.lane.b32.xlu0 %v377, 32
    %v380 = vpop.permute.xlu0 %379
    %v382 = vadd.f32 %v372, %v380
    %v383 = vtanh.pop %v382
    %385 = vrot.lane.b32.xlu0 %v383, 32
    %v386 = vpop.permute.xlu0 %385
    %v388 = vmul.f32 %v370, %v386
    %390 = vrot.lane.b32.xlu0 %v388, 64
    %v391 = vpop.permute.xlu0 %390
    %s393 = scalar_lea.vmem [#allocation3], 24
    %394 = vst.msk [vmem:[%s393] sm:$0xff] %vm124, %v391
    %s395 = scalar_lea.vmem [#allocation2], 32
    %v396 = vld [vmem:[%s395] sm:$0xff]
    %v397 = vsel %vm124, %v391, 0
    %399 = vmatpush.msra.mxu0 0.0
    %400 = vmatpush.msra.mxu0 0.0
    %401 = vmatpush.msra.mxu0 0.0
    %402 = vmatpush.msra.mxu0 0.0
    %403 = vmatpush.msra.mxu0 0.0
    %404 = vmatpush.msra.mxu0 0.0
    %405 = vmatpush.msra.mxu0 0.0
    %406 = vmatpush.msra.mxu0 0.0
    %407 = vmatpush.msra.mxu0 0.0
    %408 = vmatpush.msra.mxu0 0.0
    %409 = vmatpush.msra.mxu0 0.0
    %410 = vmatpush.msra.mxu0 0.0
    %411 = vmatpush.msra.mxu0 %v122
    %412 = vmatpush.msra.mxu0 %v121
    %413 = vmatpush.msra.mxu0 %v120
    %414 = vmatpush.msra.mxu0 %v119
    %415 = vmatmul.f32.gmra.mxu0 %v397
    %v416 = vpop.f32.mrf.mxu0
    %v417 = vadd.f32 0.0, %v416
    %418 = vdwg.mxu0
    %v419 = vadd.f32 %v396, %v417
    %v420 = vxor.u32 %v419, 2147483648
    %v421 = vmul.f32 %v420, 1.442695
    %v422 = vpow.pop %v421
    %v423 = vadd.f32 %v422, 1.0
    %v424 = vrcp.pop %v423
    %v425 = vmul.f32 %v423, %v424
    %v426 = vsub.f32 1.0, %v425
    %v427 = vmul.f32 %v424, %v426
    %v428 = vadd.f32 %v424, %v427
    %vm429 = vweird.f32 %v423
    %vm430 = vweird.f32 %v424
    %vm431 = vmor %vm429, %vm430
    %v432 = vsel %vm431, %v424, %v428
    %v433 = vand.u32 2147483647, %v423
    %vm434 = vcmp.eq.f32.partialorder %v433, 8.507059e+37
    %v435 = vand.u32 %v423, 2147483648
    %v436 = vor.u32 1.1754944e-38, %v435
    %v437 = vsel %vm434, %v436, %v432
    %v438 = vmul.f32 1.0, %v437
    %v439 = vtanh.pop %v419
    %v440 = vmul.f32 %v438, %v382
    %442 = vrot.lane.b32.xlu0 %v439, 32
    %v443 = vpop.permute.xlu0 %442
    %v445 = vmul.f32 %v438, %v443
    %447 = vrot.lane.b32.xlu0 %v445, 32
    %v448 = vpop.permute.xlu0 %447
    %v450 = vadd.f32 %v440, %v448
    %v451 = vtanh.pop %v450
    %453 = vrot.lane.b32.xlu0 %v451, 32
    %v454 = vpop.permute.xlu0 %453
    %v456 = vmul.f32 %v438, %v454
    %458 = vrot.lane.b32.xlu0 %v456, 64
    %v459 = vpop.permute.xlu0 %458
    %s461 = scalar_lea.vmem [#allocation3], 32
    %462 = vst.msk [vmem:[%s461] sm:$0xff] %vm124, %v459
    %s463 = scalar_lea.vmem [#allocation2], 40
    %v464 = vld [vmem:[%s463] sm:$0xff]
    %v465 = vsel %vm124, %v459, 0
    %467 = vmatpush.msra.mxu0 0.0
    %468 = vmatpush.msra.mxu0 0.0
    %469 = vmatpush.msra.mxu0 0.0
    %470 = vmatpush.msra.mxu0 0.0
    %471 = vmatpush.msra.mxu0 0.0
    %472 = vmatpush.msra.mxu0 0.0
    %473 = vmatpush.msra.mxu0 0.0
    %474 = vmatpush.msra.mxu0 0.0
    %475 = vmatpush.msra.mxu0 0.0
    %476 = vmatpush.msra.mxu0 0.0
    %477 = vmatpush.msra.mxu0 0.0
    %478 = vmatpush.msra.mxu0 0.0
    %479 = vmatpush.msra.mxu0 %v122
    %480 = vmatpush.msra.mxu0 %v121
    %481 = vmatpush.msra.mxu0 %v120
    %482 = vmatpush.msra.mxu0 %v119
    %483 = vmatmul.f32.gmra.mxu0 %v465
    %v484 = vpop.f32.mrf.mxu0
    %v485 = vadd.f32 0.0, %v484
    %486 = vdwg.mxu0
    %v487 = vadd.f32 %v464, %v485
    %v488 = vxor.u32 %v487, 2147483648
    %v489 = vmul.f32 %v488, 1.442695
    %v490 = vpow.pop %v489
    %v491 = vadd.f32 %v490, 1.0
    %v492 = vrcp.pop %v491
    %v493 = vmul.f32 %v491, %v492
    %v494 = vsub.f32 1.0, %v493
    %v495 = vmul.f32 %v492, %v494
    %v496 = vadd.f32 %v492, %v495
    %vm497 = vweird.f32 %v491
    %vm498 = vweird.f32 %v492
    %vm499 = vmor %vm497, %vm498
    %v500 = vsel %vm499, %v492, %v496
    %v501 = vand.u32 2147483647, %v491
    %vm502 = vcmp.eq.f32.partialorder %v501, 8.507059e+37
    %v503 = vand.u32 %v491, 2147483648
    %v504 = vor.u32 1.1754944e-38, %v503
    %v505 = vsel %vm502, %v504, %v500
    %v506 = vmul.f32 1.0, %v505
    %v507 = vtanh.pop %v487
    %v508 = vmul.f32 %v506, %v450
    %510 = vrot.lane.b32.xlu0 %v507, 32
    %v511 = vpop.permute.xlu0 %510
    %v513 = vmul.f32 %v506, %v511
    %515 = vrot.lane.b32.xlu0 %v513, 32
    %v516 = vpop.permute.xlu0 %515
    %v518 = vadd.f32 %v508, %v516
    %v519 = vtanh.pop %v518
    %521 = vrot.lane.b32.xlu0 %v519, 32
    %v522 = vpop.permute.xlu0 %521
    %v524 = vmul.f32 %v506, %v522
    %526 = vrot.lane.b32.xlu0 %v524, 64
    %v527 = vpop.permute.xlu0 %526
    %s529 = scalar_lea.vmem [#allocation3], 40
    %530 = vst.msk [vmem:[%s529] sm:$0xff] %vm124, %v527
    %s531 = scalar_lea.vmem [#allocation2], 48
    %v532 = vld [vmem:[%s531] sm:$0xff]
    %v533 = vsel %vm124, %v527, 0
    %535 = vmatpush.msra.mxu0 0.0
    %536 = vmatpush.msra.mxu0 0.0
    %537 = vmatpush.msra.mxu0 0.0
    %538 = vmatpush.msra.mxu0 0.0
    %539 = vmatpush.msra.mxu0 0.0
    %540 = vmatpush.msra.mxu0 0.0
    %541 = vmatpush.msra.mxu0 0.0
    %542 = vmatpush.msra.mxu0 0.0
    %543 = vmatpush.msra.mxu0 0.0
    %544 = vmatpush.msra.mxu0 0.0
    %545 = vmatpush.msra.mxu0 0.0
    %546 = vmatpush.msra.mxu0 0.0
    %547 = vmatpush.msra.mxu0 %v122
    %548 = vmatpush.msra.mxu0 %v121
    %549 = vmatpush.msra.mxu0 %v120
    %550 = vmatpush.msra.mxu0 %v119
    %551 = vmatmul.f32.gmra.mxu0 %v533
    %v552 = vpop.f32.mrf.mxu0
    %v553 = vadd.f32 0.0, %v552
    %554 = vdwg.mxu0
    %v555 = vadd.f32 %v532, %v553
    %v556 = vxor.u32 %v555, 2147483648
    %v557 = vmul.f32 %v556, 1.442695
    %v558 = vpow.pop %v557
    %v559 = vadd.f32 %v558, 1.0
    %v560 = vrcp.pop %v559
    %v561 = vmul.f32 %v559, %v560
    %v562 = vsub.f32 1.0, %v561
    %v563 = vmul.f32 %v560, %v562
    %v564 = vadd.f32 %v560, %v563
    %vm565 = vweird.f32 %v559
    %vm566 = vweird.f32 %v560
    %vm567 = vmor %vm565, %vm566
    %v568 = vsel %vm567, %v560, %v564
    %v569 = vand.u32 2147483647, %v559
    %vm570 = vcmp.eq.f32.partialorder %v569, 8.507059e+37
    %v571 = vand.u32 %v559, 2147483648
    %v572 = vor.u32 1.1754944e-38, %v571
    %v573 = vsel %vm570, %v572, %v568
    %v574 = vmul.f32 1.0, %v573
    %v575 = vtanh.pop %v555
    %v576 = vmul.f32 %v574, %v518
    %578 = vrot.lane.b32.xlu0 %v575, 32
    %v579 = vpop.permute.xlu0 %578
    %v581 = vmul.f32 %v574, %v579
    %583 = vrot.lane.b32.xlu0 %v581, 32
    %v584 = vpop.permute.xlu0 %583
    %v586 = vadd.f32 %v576, %v584
    %v587 = vtanh.pop %v586
    %589 = vrot.lane.b32.xlu0 %v587, 32
    %v590 = vpop.permute.xlu0 %589
    %v592 = vmul.f32 %v574, %v590
    %594 = vrot.lane.b32.xlu0 %v592, 64
    %v595 = vpop.permute.xlu0 %594
    %s597 = scalar_lea.vmem [#allocation3], 48
    %598 = vst.msk [vmem:[%s597] sm:$0xff] %vm124, %v595
    %s599 = scalar_lea.vmem [#allocation2], 56
    %v600 = vld [vmem:[%s599] sm:$0xff]
    %v601 = vsel %vm124, %v595, 0
    %603 = vmatpush.msra.mxu0 0.0
    %604 = vmatpush.msra.mxu0 0.0
    %605 = vmatpush.msra.mxu0 0.0
    %606 = vmatpush.msra.mxu0 0.0
    %607 = vmatpush.msra.mxu0 0.0
    %608 = vmatpush.msra.mxu0 0.0
    %609 = vmatpush.msra.mxu0 0.0
    %610 = vmatpush.msra.mxu0 0.0
    %611 = vmatpush.msra.mxu0 0.0
    %612 = vmatpush.msra.mxu0 0.0
    %613 = vmatpush.msra.mxu0 0.0
    %614 = vmatpush.msra.mxu0 0.0
    %615 = vmatpush.msra.mxu0 %v122
    %616 = vmatpush.msra.mxu0 %v121
    %617 = vmatpush.msra.mxu0 %v120
    %618 = vmatpush.msra.mxu0 %v119
    %619 = vmatmul.f32.gmra.mxu0 %v601
    %v620 = vpop.f32.mrf.mxu0
    %v621 = vadd.f32 0.0, %v620
    %622 = vdwg.mxu0
    %v623 = vadd.f32 %v600, %v621
    %v624 = vxor.u32 %v623, 2147483648
    %v625 = vmul.f32 %v624, 1.442695
    %v626 = vpow.pop %v625
    %v627 = vadd.f32 %v626, 1.0
    %v628 = vrcp.pop %v627
    %v629 = vmul.f32 %v627, %v628
    %v630 = vsub.f32 1.0, %v629
    %v631 = vmul.f32 %v628, %v630
    %v632 = vadd.f32 %v628, %v631
    %vm633 = vweird.f32 %v627
    %vm634 = vweird.f32 %v628
    %vm635 = vmor %vm633, %vm634
    %v636 = vsel %vm635, %v628, %v632
    %v637 = vand.u32 2147483647, %v627
    %vm638 = vcmp.eq.f32.partialorder %v637, 8.507059e+37
    %v639 = vand.u32 %v627, 2147483648
    %v640 = vor.u32 1.1754944e-38, %v639
    %v641 = vsel %vm638, %v640, %v636
    %v642 = vmul.f32 1.0, %v641
    %v643 = vtanh.pop %v623
    %v644 = vmul.f32 %v642, %v586
    %646 = vrot.lane.b32.xlu0 %v643, 32
    %v647 = vpop.permute.xlu0 %646
    %v649 = vmul.f32 %v642, %v647
    %651 = vrot.lane.b32.xlu0 %v649, 32
    %v652 = vpop.permute.xlu0 %651
    %v654 = vadd.f32 %v644, %v652
    %v655 = vtanh.pop %v654
    %657 = vrot.lane.b32.xlu0 %v655, 32
    %v658 = vpop.permute.xlu0 %657
    %v660 = vmul.f32 %v642, %v658
    %662 = vrot.lane.b32.xlu0 %v660, 64
    %v663 = vpop.permute.xlu0 %662
    %s665 = scalar_lea.vmem [#allocation3], 56
    %666 = vst.msk [vmem:[%s665] sm:$0xff] %vm124, %v663
    %667 = vst.msk [vmem:[#allocation6] sm:$0xff] %vm124, %v663
    %669 = vrot.lane.b32.xlu0 %v654, 96
    %v670 = vpop.permute.xlu0 %669
    %672 = vst.msk [vmem:[#allocation8] sm:$0xff] %vm124, %v670
    %v673 = vld [vmem:[#allocation3] sm:$0xff]
    %v674 = vld [vmem:[#allocation3 + $0x8] sm:$0xff]
    %v675 = vld [vmem:[#allocation3 + $0x10] sm:$0xff]
    %v676 = vld [vmem:[#allocation3 + $0x18] sm:$0xff]
    %v677 = vld [vmem:[#allocation3 + $0x20] sm:$0xff]
    %v678 = vld [vmem:[#allocation3 + $0x28] sm:$0xff]
    %v679 = vld [vmem:[#allocation3 + $0x30] sm:$0xff]
    %v680 = vld [vmem:[#allocation3 + $0x38] sm:$0xff]
    %v681 = vld [vmem:[%s4] sm:$0xff]
    %v682 = vld [vmem:[%s4 + $0x8] sm:$0xff]
    %v683 = vld [vmem:[%s4 + $0x10] sm:$0xff]
    %v684 = vld [vmem:[%s4 + $0x18] sm:$0xff]
    %v685 = vld [vmem:[%s5] sm:$0x1]
    %v687 = vperm.slane %v685, 0
    %v690 = vsel %vm124, %v673, 0
    %v693 = vsel %vm124, %v674, 0
    %v696 = vsel %vm124, %v675, 0
    %v699 = vsel %vm124, %v676, 0
    %v702 = vsel %vm124, %v677, 0
    %v705 = vsel %vm124, %v678, 0
    %v708 = vsel %vm124, %v679, 0
    %v711 = vsel %vm124, %v680, 0
    %713 = vmatpush.msra.mxu0 0.0
    %714 = vmatpush.msra.mxu0 0.0
    %715 = vmatpush.msra.mxu0 0.0
    %716 = vmatpush.msra.mxu0 0.0
    %717 = vmatpush.msra.mxu0 0.0
    %718 = vmatpush.msra.mxu0 0.0
    %719 = vmatpush.msra.mxu0 0.0
    %720 = vmatpush.msra.mxu0 0.0
    %721 = vmatpush.msra.mxu0 0.0
    %722 = vmatpush.msra.mxu0 0.0
    %723 = vmatpush.msra.mxu0 0.0
    %724 = vmatpush.msra.mxu0 0.0
    %725 = vmatpush.msra.mxu0 %v684
    %726 = vmatpush.msra.mxu0 %v683
    %727 = vmatpush.msra.mxu0 %v682
    %728 = vmatpush.msra.mxu0 %v681
    %729 = vmatmul.f32.gmra.mxu0 %v690
    %v730 = vpop.f32.mrf.mxu0
    %v731 = vadd.f32 %v687, %v730
    %732 = vmatmul.f32.gmra.mxu0 %v693
    %v733 = vpop.f32.mrf.mxu0
    %v734 = vadd.f32 %v687, %v733
    %735 = vmatmul.f32.gmra.mxu0 %v696
    %v736 = vpop.f32.mrf.mxu0
    %v737 = vadd.f32 %v687, %v736
    %738 = vmatmul.f32.gmra.mxu0 %v699
    %v739 = vpop.f32.mrf.mxu0
    %v740 = vadd.f32 %v687, %v739
    %741 = vmatmul.f32.gmra.mxu0 %v702
    %v742 = vpop.f32.mrf.mxu0
    %v743 = vadd.f32 %v687, %v742
    %744 = vmatmul.f32.gmra.mxu0 %v705
    %v745 = vpop.f32.mrf.mxu0
    %v746 = vadd.f32 %v687, %v745
    %747 = vmatmul.f32.gmra.mxu0 %v708
    %v748 = vpop.f32.mrf.mxu0
    %v749 = vadd.f32 %v687, %v748
    %750 = vmatmul.f32.gmra.mxu0 %v711
    %v751 = vpop.f32.mrf.mxu0
    %v752 = vadd.f32 %v687, %v751
    %753 = vdwg.mxu0
    %754 = vst [vmem:[#allocation4] sm:$0xff] %v731
    %755 = vst [vmem:[#allocation4 + $0x8] sm:$0xff] %v734
    %756 = vst [vmem:[#allocation4 + $0x10] sm:$0xff] %v737
    %757 = vst [vmem:[#allocation4 + $0x18] sm:$0xff] %v740
    %758 = vst [vmem:[#allocation4 + $0x20] sm:$0xff] %v743
    %759 = vst [vmem:[#allocation4 + $0x28] sm:$0xff] %v746
    %760 = vst [vmem:[#allocation4 + $0x30] sm:$0xff] %v749
    %761 = vst [vmem:[#allocation4 + $0x38] sm:$0xff] %v752
    // Predicated region
    $region26: #{tpu_custom_call.1} parent=1 // pred_check
      _
    $region27: #{tpu_custom_call.1} parent=1 // pred_check_branch
      %763 = sbr.rel (0) target = $region29
    $region28: #{tpu_custom_call.1} parent=1 // pred_region
      %765 = vsyncadd [#allocation5], 0
      %s766 = sshll.u32 [#allocation4], 4
      %s767 = int_to_ptr.vmem [resolvable:$true] %s766
      %s768 = sshll.u32 %s6, 4
      %s769 = int_to_ptr.hbm [resolvable:$true] %s768
      %774 = dma.vmem_to_hbm [thread:$0]  %s767, 1024, %s769, [#allocation5], 128, 128, 8
    $region29: #{tpu_custom_call.1} parent=1 // pred_fallthru
      _
    // Predicated region
    $region30: #{tpu_custom_call.1} parent=1 // pred_check
      _
    $region31: #{tpu_custom_call.1} parent=1 // pred_check_branch
      %776 = sbr.rel (0) target = $region33
    $region32: #{tpu_custom_call.1} parent=1 // pred_region
      %778 = vsyncadd [#allocation7], 0
      %s780 = sshll.u32 [#allocation6], 4
      %s781 = int_to_ptr.vmem [resolvable:$true] %s780
      %s782 = sshll.u32 %s7, 4
      %s783 = int_to_ptr.hbm [resolvable:$true] %s782
      %785 = dma.vmem_to_hbm [thread:$0]  %s781, 128, %s783, [#allocation7]
    $region33: #{tpu_custom_call.1} parent=1 // pred_fallthru
      _
    // Predicated region
    $region34: #{tpu_custom_call.1} parent=1 // pred_check
      _
    $region35: #{tpu_custom_call.1} parent=1 // pred_check_branch
      %787 = sbr.rel (0) target = $region37
    $region36: #{tpu_custom_call.1} parent=1 // pred_region
      %789 = vsyncadd [#allocation7], 0
      %s791 = sshll.u32 [#allocation8], 4
      %s792 = int_to_ptr.vmem [resolvable:$true] %s791
      %s793 = sshll.u32 %s8, 4
      %s794 = int_to_ptr.hbm [resolvable:$true] %s793
      %796 = dma.vmem_to_hbm [thread:$0]  %s792, 128, %s794, [#allocation7]
    $region37: #{tpu_custom_call.1} parent=1 // pred_fallthru
      _
    // Predicated region
    $region38: #{tpu_custom_call.1} parent=1 // pred_check
      _
    $region39: #{tpu_custom_call.1} parent=1 // pred_check_branch
      %798 = sbr.rel (0) target = $region41
    $region40: #{tpu_custom_call.1} parent=1 // pred_region
      %800 = dma.done [#allocation5], 1024
    $region41: #{tpu_custom_call.1} parent=1 // pred_fallthru
      _
    // Predicated region
    $region42: #{tpu_custom_call.1} parent=1 // pred_check
      _
    $region43: #{tpu_custom_call.1} parent=1 // pred_check_branch
      %802 = sbr.rel (0) target = $region45
    $region44: #{tpu_custom_call.1} parent=1 // pred_region
      %804 = dma.done [#allocation7], 128
    $region45: #{tpu_custom_call.1} parent=1 // pred_fallthru
      _
    // Predicated region
    $region46: #{tpu_custom_call.1} parent=1 // pred_check
      _
    $region47: #{tpu_custom_call.1} parent=1 // pred_check_branch
      %806 = sbr.rel (0) target = $region49
    $region48: #{tpu_custom_call.1} parent=1 // pred_region
      %808 = dma.done [#allocation7], 128
    $region49: #{tpu_custom_call.1} parent=1 // pred_fallthru
      _
    %809 = vsyncpa [#allocation5], 1
    %810 = vsyncpa [#allocation7], 1

</llo_original>
